<compile_context>
chip_gen: v5e
topology: v5e:2x2
jax: 0.10.0
libtpu: 0.0.40
codegen_flags: <defaults>
</compile_context>

<pallas_src>
import functools

import jax
import jax.numpy as jnp
from jax import lax
from jax.experimental import pallas as pl
from jax.experimental.pallas import tpu as pltpu

ALMOST_INF = 9999.9                 # matches the PyTorch module
BIG = 1.0e30                        # "never wins a min" sentinel (sqrt stays finite)
PAD_SQN = 1.0e30                    # squared-norm sentinel for padded candidate rows
PAD_PID = int(jnp.iinfo(jnp.int32).min)  # pid sentinel for padded rows / columns


def _apply_margin(x, m):
    if isinstance(m, float):
        return jnp.maximum(x + m, 0.0)
    elif isinstance(m, str) and m.lower() == "soft":
        return jnp.logaddexp(0.0, x)          # softplus
    elif isinstance(m, str) and m.lower() == "none":
        return x
    else:
        raise NotImplementedError("The margin %s is not implemented!" % m)


def _round_up(x, m):
    return ((x + m - 1) // m) * m


def _fused_kernel(x_rows_ref, x_cols_ref, sqn_rows_ref, sqn_cols_ref,
                  pid_rows_ref, pid_cols_ref, logits_ref,
                  bh_ref, ce_ref,
                  *, margin, n_valid, b_valid, num_junk,
                  tile_row, tile_col, num_row_strips):
    """One anchor/column block of the fused batch-hard + junk-CE loss.

    x_rows_ref : (NR, Dp)        full candidate embeddings, VMEM-resident (constant idx)
    x_cols_ref : (tile_col, Dp)  anchor embeddings of this column block
    sqn_*      : squared norms   rows (NR,1) with PAD_SQN sentinel / cols (1,tile_col)
    pid_*      : pids            rows (NR,1) / cols (1,tile_col), PAD_PID for padding
    logits_ref : (C, tile_col)   junk logits, classes on sublanes
    bh_ref     : (1, tile_col)   per-anchor batch-hard loss (zero for padded anchors)
    ce_ref     : (1, tile_col)   per-sample CE loss          (zero for padded samples)
    """
    j = pl.program_id(0)

    x_cols = x_cols_ref[...]                    # (Tc, Dp), gram dtype
    sqn_j = sqn_cols_ref[...]                   # (1, Tc) f32
    pid_j = pid_cols_ref[...]                   # (1, Tc) i32

    def strip(s, carry):
        max_pos_d2, min_pos_d2, min_neg_d2 = carry
        r0 = pl.multiple_of(s * tile_row, tile_row)
        x_i = x_rows_ref[pl.ds(r0, tile_row), :]            # (Tr, Dp)
        sqn_i = sqn_rows_ref[pl.ds(r0, tile_row), :]        # (Tr, 1)
        pid_i = pid_rows_ref[pl.ds(r0, tile_row), :]        # (Tr, 1)

        # Flash-attention-style A.B^T on the MXU: contract Dp against Dp directly on the
        # row-major layouts (no transposed copy of x; same pattern as the QK^T einsum in
        # the reference flash kernels, no per-strip XLU transpose expected).
        gram = lax.dot_general(x_i, x_cols,
                               dimension_numbers=(((1,), (1,)), ((), ())),
                               preferred_element_type=jnp.float32)   # (Tr, Tc)

        d2 = jnp.maximum(sqn_i + sqn_j - 2.0 * gram, 0.0)            # squared distances
        same_pid = pid_i == pid_j                                    # (Tr, Tc) bool

        max_pos_d2 = jnp.maximum(
            max_pos_d2, jnp.max(jnp.where(same_pid, d2, 0.0), axis=0, keepdims=True))
        min_pos_d2 = jnp.minimum(
            min_pos_d2, jnp.min(jnp.where(same_pid, d2, BIG), axis=0, keepdims=True))
        min_neg_d2 = jnp.minimum(
            min_neg_d2, jnp.min(jnp.where(same_pid, BIG, d2), axis=0, keepdims=True))
        return max_pos_d2, min_pos_d2, min_neg_d2

    init = (jnp.zeros((1, tile_col), jnp.float32),
            jnp.full((1, tile_col), BIG, jnp.float32),
            jnp.full((1, tile_col), BIG, jnp.float32))
    max_pos_d2, min_pos_d2, min_neg_d2 = lax.fori_loop(
        0, num_row_strips, strip, init, unroll=num_row_strips <= 8)

    # sqrt only on the (1, Tc) accumulators.  fn reproduces PyTorch's
    # min(cdist + ALMOST_INF * mask_pos) exactly: min over negatives vs.
    # (closest positive + ALMOST_INF), including the all-positive-anchor edge case.
    fp = jnp.sqrt(max_pos_d2 + 1e-12)
    fn = jnp.minimum(jnp.sqrt(min_neg_d2 + 1e-12),
                     jnp.sqrt(min_pos_d2 + 1e-12) + ALMOST_INF)

    col_ids = j * tile_col + lax.broadcasted_iota(jnp.int32, (1, tile_col), 1)
    bh = _apply_margin(fp - fn, margin)
    bh_ref[...] = jnp.where(col_ids < n_valid, bh, 0.0)       # zero padded anchors

    # Cross entropy on the junk logits of this column block (targets in {0, 1}).
    logits = logits_ref[...]                                  # (C, Tc)
    m = jnp.max(logits, axis=0, keepdims=True)
    z = logits - m
    lse = jnp.log(jnp.sum(jnp.exp(z), axis=0, keepdims=True))
    logp = z - lse                                            # (C, Tc) log-softmax
    tgt_is_junk = col_ids >= (b_valid - num_junk)             # target == 1
    picked = jnp.where(tgt_is_junk, logp[1:2, :], logp[0:1, :])
    ce_ref[...] = jnp.where(col_ids < b_valid, -picked, 0.0)  # zero padded samples


def batch_hard_with_junk_softmax(pids, triplet_emb, junk_logits, *,
                                 margin, num_junk_images,
                                 tile_row=128, tile_col=256,
                                 gram_dtype=jnp.float32):
    """Forward pass of BatchHardWithJunkSoftmax. Returns the scalar loss."""
    B, D = triplet_emb.shape
    Bc, C = junk_logits.shape
    assert B == Bc == pids.shape[0]
    assert C >= 2
    N = B - num_junk_images
    assert N > 0
    assert tile_row % 128 == 0 and tile_col % 128 == 0

    Dp = _round_up(D, 128)                   # lane-dense K dim for the MXU
    NR = _round_up(N, tile_row)              # candidate (row) extent, VMEM resident
    NP = _round_up(max(B, NR), tile_col)     # anchor / CE (column) extent, >= NR

    # ---- glue: padding, one-shot f32 squared norms, sentinels, optional bf16 cast ----
    x = triplet_emb[:N].astype(jnp.float32)
    xp = jnp.zeros((NP, Dp), jnp.float32).at[:N, :D].set(x)
    sqn = jnp.sum(xp * xp, axis=-1)                             # (NP,) f32, computed once
    valid = jnp.arange(NP) < N
    sqn_rows = jnp.where(valid, sqn, PAD_SQN).reshape(NP, 1)    # padded rows never win a min
    sqn_cols = sqn.reshape(1, NP)
    pid_pad = jnp.full((NP,), PAD_PID, dtype=jnp.int32).at[:N].set(
        pids[:N].astype(jnp.int32))
    pid_rows = pid_pad.reshape(NP, 1)
    pid_cols = pid_pad.reshape(1, NP)
    logits_t = jnp.zeros((C, NP), jnp.float32).at[:, :B].set(
        junk_logits.astype(jnp.float32).T)                      # classes on sublanes

    xp_feed = xp.astype(gram_dtype)      # bf16 cast (if requested) happens once, in glue
    x_isz = jnp.dtype(gram_dtype).itemsize

    num_row_strips = NR // tile_row
    grid = (NP // tile_col,)             # anchor blocks only; rows reduced in-kernel

    # VMEM budget: double-buffered input blocks + live (Tr,Tc) work tiles + slack.
    vmem_need = (2 * (NR * Dp * x_isz + tile_col * Dp * x_isz)
                 + 2 * (2 * NR * 4 + 2 * tile_col * 4 + C * tile_col * 4)
                 + 2 * 2 * tile_col * 4
                 + 6 * tile_row * tile_col * 4)
    vmem_limit = int(min(max(2 * vmem_need, 32 << 20), 100 << 20))

    cost = pl.CostEstimate(
        flops=int(2 * NP * NR * Dp + 10 * NP * NR),
        transcendentals=int(3 * NP + NP * (C + 1)),
        bytes_accessed=int((NP + NR) * Dp * x_isz + NP * (C + 4) * 4 + 2 * NP * 4),
    )

    kernel = functools.partial(
        _fused_kernel, margin=margin, n_valid=N, b_valid=B,
        num_junk=num_junk_images, tile_row=tile_row, tile_col=tile_col,
        num_row_strips=num_row_strips)

    bh_out, ce_out = pl.pallas_call(
        kernel,
        grid=grid,
        in_specs=[
            pl.BlockSpec((NR, Dp), lambda j: (0, 0)),        # resident candidate rows
            pl.BlockSpec((tile_col, Dp), lambda j: (j, 0)),  # anchor column block
            pl.BlockSpec((NR, 1), lambda j: (0, 0)),         # row squared norms (+sentinel)
            pl.BlockSpec((1, tile_col), lambda j: (0, j)),   # column squared norms
            pl.BlockSpec((NR, 1), lambda j: (0, 0)),         # row pids
            pl.BlockSpec((1, tile_col), lambda j: (0, j)),   # column pids
            pl.BlockSpec((C, tile_col), lambda j: (0, j)),   # junk logits (C, Tc)
        ],
        out_specs=[
            pl.BlockSpec((1, tile_col), lambda j: (0, j)),   # per-anchor bh loss
            pl.BlockSpec((1, tile_col), lambda j: (0, j)),   # per-sample CE loss
        ],
        out_shape=(
            jax.ShapeDtypeStruct((1, NP), jnp.float32),
            jax.ShapeDtypeStruct((1, NP), jnp.float32),
        ),
        compiler_params=pltpu.CompilerParams(
            dimension_semantics=("parallel",),
            vmem_limit_bytes=vmem_limit),
        cost_estimate=cost,
    )(xp_feed, xp_feed, sqn_rows, sqn_cols, pid_rows, pid_cols, logits_t)

    # Padded entries are exact zeros, so the means are plain sums over valid counts.
    return jnp.sum(bh_out) / N + jnp.sum(ce_out) / B


def _reference(pids, triplet_emb, junk_logits, *, margin, num_junk_images):
    """Pure-JAX reference mirroring the PyTorch module (for a sanity check)."""
    N = triplet_emb.shape[0] - num_junk_images
    a = triplet_emb[:N].astype(jnp.float32)
    p = pids[:N]
    diff = a[:, None, :] - a[None, :, :]
    cdist = jnp.sqrt(jnp.sum(diff * diff, axis=-1) + 1e-12)
    mask_pos = (p[None, :] == p[:, None]).astype(jnp.float32)
    fp = jnp.max(cdist * mask_pos, axis=0)
    fn = jnp.min(cdist + ALMOST_INF * mask_pos, axis=0)
    bh = _apply_margin(fp - fn, margin)

    logits = junk_logits.astype(jnp.float32)
    B = logits.shape[0]
    targets = jnp.where(jnp.arange(B) >= B - num_junk_images, 1, 0)
    logp = jax.nn.log_softmax(logits, axis=-1)
    ce = -jnp.take_along_axis(logp, targets[:, None], axis=-1)[:, 0]
    return jnp.mean(bh) + jnp.mean(ce)


if __name__ == "__main__":
    # Small synthetic shapes: batch B=8 (last J=2 are junk), embedding dim D=32, C=2.
    B, D, C = 8, 32, 2
    J = 2
    MARGIN = 0.2

    key = jax.random.PRNGKey(0)
    k_emb, k_junk = jax.random.split(key)
    triplet_emb = jax.random.normal(k_emb, (B, D), dtype=jnp.float32)
    junk_logits = jax.random.normal(k_junk, (B, C), dtype=jnp.float32)
    pids = jnp.array([0, 0, 1, 1, 2, 2, 7, 7], dtype=jnp.int32)

    loss = batch_hard_with_junk_softmax(
        pids, triplet_emb, junk_logits, margin=MARGIN, num_junk_images=J
    )
    loss = jax.block_until_ready(loss)

    ref = _reference(pids, triplet_emb, junk_logits, margin=MARGIN, num_junk_images=J)
    assert jnp.allclose(loss, ref, rtol=1e-3, atol=1e-3), (loss, ref)

    print("KERNEL_OK")
</pallas_src>

<mosaic_0001>
module attributes {stable_mosaic.version = 11 : i64} {
  func.func @_fused_kernel(%arg0: i32, %arg1: memref<128x128xf32, #tpu.memory_space<vmem>>, %arg2: memref<256x128xf32, #tpu.memory_space<vmem>>, %arg3: memref<128x1xf32, #tpu.memory_space<vmem>>, %arg4: memref<1x256xf32, #tpu.memory_space<vmem>>, %arg5: memref<128x1xi32, #tpu.memory_space<vmem>>, %arg6: memref<1x256xi32, #tpu.memory_space<vmem>>, %arg7: memref<2x256xf32, #tpu.memory_space<vmem>>, %arg8: memref<1x256xf32, #tpu.memory_space<vmem>>, %arg9: memref<1x256xf32, #tpu.memory_space<vmem>>) attributes {dimension_semantics = [#tpu.dimension_semantics<parallel>], iteration_bounds = array<i64: 1>, scalar_prefetch = 0 : i64, scratch_operands = 0 : i64, tpu.core_type = #tpu.core_type<tc>, window_params = [{transform_indices = @transform_0, window_bounds = array<i64: 128, 128>}, {transform_indices = @transform_1, window_bounds = array<i64: 256, 128>}, {transform_indices = @transform_2, window_bounds = array<i64: 128, 1>}, {transform_indices = @transform_3, window_bounds = array<i64: 1, 256>}, {transform_indices = @transform_4, window_bounds = array<i64: 128, 1>}, {transform_indices = @transform_5, window_bounds = array<i64: 1, 256>}, {transform_indices = @transform_6, window_bounds = array<i64: 2, 256>}, {transform_indices = @transform_7, window_bounds = array<i64: 1, 256>}, {transform_indices = @transform_8, window_bounds = array<i64: 1, 256>}]} {
    %c0 = arith.constant 0 : index
    %c0_0 = arith.constant 0 : index
    %0 = vector.load %arg2[%c0, %c0_0] : memref<256x128xf32, #tpu.memory_space<vmem>>, vector<256x128xf32>
    %c0_1 = arith.constant 0 : index
    %c0_2 = arith.constant 0 : index
    %1 = vector.load %arg4[%c0_1, %c0_2] : memref<1x256xf32, #tpu.memory_space<vmem>>, vector<1x256xf32>
    %c0_3 = arith.constant 0 : index
    %c0_4 = arith.constant 0 : index
    %2 = vector.load %arg6[%c0_3, %c0_4] : memref<1x256xi32, #tpu.memory_space<vmem>>, vector<1x256xi32>
    %cst = arith.constant 0.000000e+00 : f32
    %3 = vector.broadcast %cst : f32 to vector<1x256xf32>
    %cst_5 = arith.constant 1.000000e+30 : f32
    %4 = vector.broadcast %cst_5 : f32 to vector<1x256xf32>
    %cst_6 = arith.constant 1.000000e+30 : f32
    %5 = vector.broadcast %cst_6 : f32 to vector<1x256xf32>
    %c0_i32 = arith.constant 0 : i32
    %c128_i32 = arith.constant 128 : i32
    %6 = arith.muli %c0_i32, %c128_i32 : i32
    %7 = tpu.assume_multiple %6, 128 : i32
    %8 = arith.index_cast %7 : i32 to index
    %c0_7 = arith.constant 0 : index
    %9 = vector.load %arg1[%8, %c0_7] : memref<128x128xf32, #tpu.memory_space<vmem>>, vector<128x128xf32>
    %10 = arith.index_cast %7 : i32 to index
    %c0_8 = arith.constant 0 : index
    %11 = vector.load %arg3[%10, %c0_8] : memref<128x1xf32, #tpu.memory_space<vmem>>, vector<128x1xf32>
    %12 = arith.index_cast %7 : i32 to index
    %c0_9 = arith.constant 0 : index
    %13 = vector.load %arg5[%12, %c0_9] : memref<128x1xi32, #tpu.memory_space<vmem>>, vector<128x1xi32>
    %cst_10 = arith.constant dense<0.000000e+00> : vector<128x256xf32>
    %14 = tpu.matmul %9, %0, %cst_10 {dimension_numbers = #tpu.dot_dimension_numbers<[1], [1], [0], [0], [0, 0, 1, 0], [], []>} : vector<128x128xf32>, vector<256x128xf32>, vector<128x256xf32> -> vector<128x256xf32>
    %15 = vector.broadcast %11 : vector<128x1xf32> to vector<128x256xf32>
    %16 = vector.broadcast %1 : vector<1x256xf32> to vector<128x256xf32>
    %17 = arith.addf %15, %16 : vector<128x256xf32>
    %cst_11 = arith.constant 2.000000e+00 : f32
    %18 = vector.broadcast %cst_11 : f32 to vector<128x256xf32>
    %19 = arith.mulf %18, %14 : vector<128x256xf32>
    %20 = arith.subf %17, %19 : vector<128x256xf32>
    %cst_12 = arith.constant 0.000000e+00 : f32
    %21 = vector.broadcast %cst_12 : f32 to vector<128x256xf32>
    %22 = arith.maximumf %20, %21 : vector<128x256xf32>
    %23 = vector.broadcast %13 : vector<128x1xi32> to vector<128x256xi32>
    %24 = vector.broadcast %2 : vector<1x256xi32> to vector<128x256xi32>
    %25 = arith.cmpi eq, %23, %24 : vector<128x256xi32>
    %cst_13 = arith.constant 0.000000e+00 : f32
    %26 = vector.broadcast %cst_13 : f32 to vector<128x256xf32>
    %27 = arith.select %25, %22, %26 : vector<128x256xi1>, vector<128x256xf32>
    %cst_14 = arith.constant dense<0xFF800000> : vector<256xf32>
    %28 = vector.multi_reduction <maximumf>, %27, %cst_14 [0] : vector<128x256xf32> to vector<256xf32>
    %29 = vector.shape_cast %28 : vector<256xf32> to vector<1x256xf32>
    %30 = arith.maximumf %3, %29 : vector<1x256xf32>
    %cst_15 = arith.constant 1.000000e+30 : f32
    %31 = vector.broadcast %cst_15 : f32 to vector<128x256xf32>
    %32 = arith.select %25, %22, %31 : vector<128x256xi1>, vector<128x256xf32>
    %cst_16 = arith.constant dense<0x7F800000> : vector<256xf32>
    %33 = vector.multi_reduction <minimumf>, %32, %cst_16 [0] : vector<128x256xf32> to vector<256xf32>
    %34 = vector.shape_cast %33 : vector<256xf32> to vector<1x256xf32>
    %35 = arith.minimumf %4, %34 : vector<1x256xf32>
    %cst_17 = arith.constant 1.000000e+30 : f32
    %36 = vector.broadcast %cst_17 : f32 to vector<128x256xf32>
    %37 = arith.select %25, %36, %22 : vector<128x256xi1>, vector<128x256xf32>
    %cst_18 = arith.constant dense<0x7F800000> : vector<256xf32>
    %38 = vector.multi_reduction <minimumf>, %37, %cst_18 [0] : vector<128x256xf32> to vector<256xf32>
    %39 = vector.shape_cast %38 : vector<256xf32> to vector<1x256xf32>
    %40 = arith.minimumf %5, %39 : vector<1x256xf32>
    %c1_i32 = arith.constant 1 : i32
    %cst_19 = arith.constant 9.99999996E-13 : f32
    %41 = vector.broadcast %cst_19 : f32 to vector<1x256xf32>
    %42 = arith.addf %30, %41 : vector<1x256xf32>
    %43 = math.sqrt %42 : vector<1x256xf32>
    %cst_20 = arith.constant 9.99999996E-13 : f32
    %44 = vector.broadcast %cst_20 : f32 to vector<1x256xf32>
    %45 = arith.addf %40, %44 : vector<1x256xf32>
    %46 = math.sqrt %45 : vector<1x256xf32>
    %cst_21 = arith.constant 9.99999996E-13 : f32
    %47 = vector.broadcast %cst_21 : f32 to vector<1x256xf32>
    %48 = arith.addf %35, %47 : vector<1x256xf32>
    %49 = math.sqrt %48 : vector<1x256xf32>
    %cst_22 = arith.constant 9.999900e+03 : f32
    %50 = vector.broadcast %cst_22 : f32 to vector<1x256xf32>
    %51 = arith.addf %49, %50 : vector<1x256xf32>
    %52 = arith.minimumf %46, %51 : vector<1x256xf32>
    %c256_i32 = arith.constant 256 : i32
    %53 = arith.muli %arg0, %c256_i32 : i32
    %54 = tpu.iota {dimensions = array<i32: 1>} : vector<1x256xi32>
    %55 = vector.broadcast %53 : i32 to vector<1x256xi32>
    %56 = arith.addi %55, %54 : vector<1x256xi32>
    %57 = arith.subf %43, %52 : vector<1x256xf32>
    %cst_23 = arith.constant 2.000000e-01 : f32
    %58 = vector.broadcast %cst_23 : f32 to vector<1x256xf32>
    %59 = arith.addf %57, %58 : vector<1x256xf32>
    %cst_24 = arith.constant 0.000000e+00 : f32
    %60 = vector.broadcast %cst_24 : f32 to vector<1x256xf32>
    %61 = arith.maximumf %59, %60 : vector<1x256xf32>
    %c6_i32 = arith.constant 6 : i32
    %62 = vector.broadcast %c6_i32 : i32 to vector<1x256xi32>
    %63 = arith.cmpi slt, %56, %62 : vector<1x256xi32>
    %cst_25 = arith.constant 0.000000e+00 : f32
    %64 = vector.broadcast %cst_25 : f32 to vector<1x256xf32>
    %65 = arith.select %63, %61, %64 : vector<1x256xi1>, vector<1x256xf32>
    %c0_26 = arith.constant 0 : index
    %c0_27 = arith.constant 0 : index
    %66 = vector.load %arg8[%c0_26, %c0_27] : memref<1x256xf32, #tpu.memory_space<vmem>>, vector<1x256xf32>
    tpu.vector_store %arg8[%c0_26, %c0_27], %65 {strides = array<i32>} : memref<1x256xf32, #tpu.memory_space<vmem>>, vector<1x256xf32>,
    %c0_28 = arith.constant 0 : index
    %c0_29 = arith.constant 0 : index
    %67 = vector.load %arg7[%c0_28, %c0_29] : memref<2x256xf32, #tpu.memory_space<vmem>>, vector<2x256xf32>
    %cst_30 = arith.constant dense<0xFF800000> : vector<256xf32>
    %68 = vector.multi_reduction <maximumf>, %67, %cst_30 [0] : vector<2x256xf32> to vector<256xf32>
    %69 = vector.shape_cast %68 : vector<256xf32> to vector<1x256xf32>
    %70 = vector.broadcast %69 : vector<1x256xf32> to vector<2x256xf32>
    %71 = arith.subf %67, %70 : vector<2x256xf32>
    %72 = math.exp %71 : vector<2x256xf32>
    %cst_31 = arith.constant dense<0.000000e+00> : vector<256xf32>
    %73 = vector.multi_reduction <add>, %72, %cst_31 [0] : vector<2x256xf32> to vector<256xf32>
    %74 = vector.shape_cast %73 : vector<256xf32> to vector<1x256xf32>
    %75 = math.log %74 : vector<1x256xf32>
    %76 = vector.broadcast %75 : vector<1x256xf32> to vector<2x256xf32>
    %77 = arith.subf %71, %76 : vector<2x256xf32>
    %c6_i32_32 = arith.constant 6 : i32
    %78 = vector.broadcast %c6_i32_32 : i32 to vector<1x256xi32>
    %79 = arith.cmpi sge, %56, %78 : vector<1x256xi32>
    %80 = vector.extract_strided_slice %77 {offsets = [1, 0], sizes = [1, 256], strides = [1, 1]} : vector<2x256xf32> to vector<1x256xf32>
    %81 = vector.extract_strided_slice %77 {offsets = [0, 0], sizes = [1, 256], strides = [1, 1]} : vector<2x256xf32> to vector<1x256xf32>
    %82 = arith.select %79, %80, %81 : vector<1x256xi1>, vector<1x256xf32>
    %c8_i32 = arith.constant 8 : i32
    %83 = vector.broadcast %c8_i32 : i32 to vector<1x256xi32>
    %84 = arith.cmpi slt, %56, %83 : vector<1x256xi32>
    %cst_33 = arith.constant 0.000000e+00 : f32
    %85 = vector.broadcast %cst_33 : f32 to vector<1x256xf32>
    %86 = arith.subf %85, %82 : vector<1x256xf32>
    %cst_34 = arith.constant 0.000000e+00 : f32
    %87 = vector.broadcast %cst_34 : f32 to vector<1x256xf32>
    %88 = arith.select %84, %86, %87 : vector<1x256xi1>, vector<1x256xf32>
    %c0_35 = arith.constant 0 : index
    %c0_36 = arith.constant 0 : index
    %89 = vector.load %arg9[%c0_35, %c0_36] : memref<1x256xf32, #tpu.memory_space<vmem>>, vector<1x256xf32>
    tpu.vector_store %arg9[%c0_35, %c0_36], %88 {strides = array<i32>} : memref<1x256xf32, #tpu.memory_space<vmem>>, vector<1x256xf32>,
    return
  }
  func.func @transform_0(%arg0: i32) -> (i32, i32) {
    %c0_i32 = arith.constant 0 : i32
    %c0_i32_0 = arith.constant 0 : i32
    %c0_i32_1 = arith.constant 0 : i32
    return %c0_i32, %c0_i32_0 : i32, i32
  }
  func.func @transform_1(%arg0: i32) -> (i32, i32) {
    %c0_i32 = arith.constant 0 : i32
    %c0_i32_0 = arith.constant 0 : i32
    return %arg0, %c0_i32 : i32, i32
  }
  func.func @transform_2(%arg0: i32) -> (i32, i32) {
    %c0_i32 = arith.constant 0 : i32
    %c0_i32_0 = arith.constant 0 : i32
    %c0_i32_1 = arith.constant 0 : i32
    return %c0_i32, %c0_i32_0 : i32, i32
  }
  func.func @transform_3(%arg0: i32) -> (i32, i32) {
    %c0_i32 = arith.constant 0 : i32
    %c0_i32_0 = arith.constant 0 : i32
    return %c0_i32, %arg0 : i32, i32
  }
  func.func @transform_4(%arg0: i32) -> (i32, i32) {
    %c0_i32 = arith.constant 0 : i32
    %c0_i32_0 = arith.constant 0 : i32
    %c0_i32_1 = arith.constant 0 : i32
    return %c0_i32, %c0_i32_0 : i32, i32
  }
  func.func @transform_5(%arg0: i32) -> (i32, i32) {
    %c0_i32 = arith.constant 0 : i32
    %c0_i32_0 = arith.constant 0 : i32
    return %c0_i32, %arg0 : i32, i32
  }
  func.func @transform_6(%arg0: i32) -> (i32, i32) {
    %c0_i32 = arith.constant 0 : i32
    %c0_i32_0 = arith.constant 0 : i32
    return %c0_i32, %arg0 : i32, i32
  }
  func.func @transform_7(%arg0: i32) -> (i32, i32) {
    %c0_i32 = arith.constant 0 : i32
    %c0_i32_0 = arith.constant 0 : i32
    return %c0_i32, %arg0 : i32, i32
  }
  func.func @transform_8(%arg0: i32) -> (i32, i32) {
    %c0_i32 = arith.constant 0 : i32
    %c0_i32_0 = arith.constant 0 : i32
    return %c0_i32, %arg0 : i32, i32
  }
}

</mosaic_0001>

<llo_original>
// kernel: tpu_custom_call.1
$region0: #{tpu_custom_call.1}
  #allocation0 [shape = 'u32[]', space=smem, size = 0x4, offset = 0x4, fixed_abs, tag = 'smem constant byte address 0x4 - core index']
  #allocation1 [shape = 'u32[72,128]{1,0:T(1,128)}', space=vmem, size = 0x9000, scoped, tag = 'internal scratch']
  %s0 = inlined_call_operand.vmem [shape: f32[256,128], index: 0, kind: input, shape index: {}]
  %s1 = inlined_call_operand.vmem [shape: f32[256,128], index: 1, kind: input, shape index: {}]
  %s2 = inlined_call_operand.vmem [shape: f32[256,1], index: 2, kind: input, shape index: {}]
  %s3 = inlined_call_operand.hbm [shape: f32[1,256], index: 3, kind: input, shape index: {}]
  %s4 = inlined_call_operand.vmem [shape: s32[256,1], index: 4, kind: input, shape index: {}]
  %s5 = inlined_call_operand.hbm [shape: s32[1,256], index: 5, kind: input, shape index: {}]
  %s6 = inlined_call_operand.vmem [shape: f32[2,256], index: 6, kind: input, shape index: {}]
  %s7 = inlined_call_operand.hbm [shape: f32[1,256], index: 7, kind: output, shape index: {0}]
  %s8 = inlined_call_operand.hbm [shape: f32[1,256], index: 8, kind: output, shape index: {1}]
  %9 = xla_tuple %s7, %s8
  %s10 = sld [smem:[#allocation0]]
  $region54: #{tpu_custom_call.1} parent=0
    _
  %s12 = ssub.s32 1, %s10
  %s13 = scalar_select 0, %s12, %s10
  $region1: #{tpu_custom_call.1} parent=0
    #allocation2 [shape = 'u8[1024]{0}', space=vmem, size = 0x400, scoped, tag = 'input window, operand 3, single buffered']
    #allocation3 [shape = 's32[1]{0}', space=sflag, size = 0x4, scoped, tag = 'scoped memory for tpu_custom_call.1']
    #allocation4 [shape = 's32[1]{0}', space=sflag, size = 0x4, scoped, tag = 'scoped memory for tpu_custom_call.1']
    #allocation5 [shape = 'u8[1024]{0}', space=vmem, size = 0x400, scoped, tag = 'input window, operand 5, single buffered']
    #allocation6 [shape = 's32[1]{0}', space=sflag, size = 0x4, scoped, tag = 'scoped memory for tpu_custom_call.1']
    #allocation7 [shape = 'u8[1024]{0}', space=vmem, size = 0x400, scoped, tag = 'output window, operand 0, single buffered']
    #allocation8 [shape = 'u8[1024]{0}', space=vmem, size = 0x400, scoped, tag = 'output window, operand 1, single buffered']
    #allocation9 [shape = 's32[1]{0}', space=sflag, size = 0x4, scoped, tag = 'scoped memory for tpu_custom_call.1']
    %14 = vsyncpa [#allocation3], 0
    %15 = vsyncpa [#allocation6], 0
    %16 = vsyncpa [#allocation4], 0
    %17 = vsyncpa [#allocation9], 0
    // Predicated region
    $region2: #{tpu_custom_call.1} parent=1 // pred_check
      _
    $region3: #{tpu_custom_call.1} parent=1 // pred_check_branch
      %19 = sbr.rel (0) target = $region5
    $region4: #{tpu_custom_call.1} parent=1 // pred_region
      _
    $region5: #{tpu_custom_call.1} parent=1 // pred_fallthru
      _
    // Predicated region
    $region6: #{tpu_custom_call.1} parent=1 // pred_check
      _
    $region7: #{tpu_custom_call.1} parent=1 // pred_check_branch
      %21 = sbr.rel (0) target = $region9
    $region8: #{tpu_custom_call.1} parent=1 // pred_region
      _
    $region9: #{tpu_custom_call.1} parent=1 // pred_fallthru
      _
    // Predicated region
    $region10: #{tpu_custom_call.1} parent=1 // pred_check
      _
    $region11: #{tpu_custom_call.1} parent=1 // pred_check_branch
      %23 = sbr.rel (0) target = $region13
    $region12: #{tpu_custom_call.1} parent=1 // pred_region
      _
    $region13: #{tpu_custom_call.1} parent=1 // pred_fallthru
      _
    // Predicated region
    $region14: #{tpu_custom_call.1} parent=1 // pred_check
      _
    $region15: #{tpu_custom_call.1} parent=1 // pred_check_branch
      %25 = sbr.rel (0) target = $region17
    $region16: #{tpu_custom_call.1} parent=1 // pred_region
      %27 = vsyncadd [#allocation3], 0
      %s29 = sshll.u32 %s3, 4
      %s30 = int_to_ptr.hbm [resolvable:$true] %s29
      %s31 = sshll.u32 [#allocation2], 4
      %s32 = int_to_ptr.vmem [resolvable:$true] %s31
      %34 = dma.hbm_to_vmem [thread:$0]  %s30, 32, %s32, [#allocation3]
    $region17: #{tpu_custom_call.1} parent=1 // pred_fallthru
      _
    // Predicated region
    $region18: #{tpu_custom_call.1} parent=1 // pred_check
      _
    $region19: #{tpu_custom_call.1} parent=1 // pred_check_branch
      %36 = sbr.rel (0) target = $region21
    $region20: #{tpu_custom_call.1} parent=1 // pred_region
      _
    $region21: #{tpu_custom_call.1} parent=1 // pred_fallthru
      _
    // Predicated region
    $region22: #{tpu_custom_call.1} parent=1 // pred_check
      _
    $region23: #{tpu_custom_call.1} parent=1 // pred_check_branch
      %38 = sbr.rel (0) target = $region25
    $region24: #{tpu_custom_call.1} parent=1 // pred_region
      %40 = vsyncadd [#allocation6], 0
      %s42 = sshll.u32 %s5, 4
      %s43 = int_to_ptr.hbm [resolvable:$true] %s42
      %s44 = sshll.u32 [#allocation5], 4
      %s45 = int_to_ptr.vmem [resolvable:$true] %s44
      %47 = dma.hbm_to_vmem [thread:$0]  %s43, 32, %s45, [#allocation6]
    $region25: #{tpu_custom_call.1} parent=1 // pred_fallthru
      _
    // Predicated region
    $region26: #{tpu_custom_call.1} parent=1 // pred_check
      _
    $region27: #{tpu_custom_call.1} parent=1 // pred_check_branch
      %49 = sbr.rel (0) target = $region29
    $region28: #{tpu_custom_call.1} parent=1 // pred_region
      _
    $region29: #{tpu_custom_call.1} parent=1 // pred_fallthru
      _
    // Predicated region
    $region30: #{tpu_custom_call.1} parent=1 // pred_check
      _
    $region31: #{tpu_custom_call.1} parent=1 // pred_check_branch
      %51 = sbr.rel (0) target = $region33
    $region32: #{tpu_custom_call.1} parent=1 // pred_region
      %53 = dma.done [#allocation3], 32
    $region33: #{tpu_custom_call.1} parent=1 // pred_fallthru
      _
    // Predicated region
    $region34: #{tpu_custom_call.1} parent=1 // pred_check
      _
    $region35: #{tpu_custom_call.1} parent=1 // pred_check_branch
      %55 = sbr.rel (0) target = $region37
    $region36: #{tpu_custom_call.1} parent=1 // pred_region
      %57 = dma.done [#allocation6], 32
    $region37: #{tpu_custom_call.1} parent=1 // pred_fallthru
      _
    %v58 = vld [vmem:[%s1] sm:$0xff]
    %v59 = vld [vmem:[%s1 + $0x8] sm:$0xff]
    %v60 = vld [vmem:[%s1 + $0x10] sm:$0xff]
    %v61 = vld [vmem:[%s1 + $0x18] sm:$0xff]
    %v62 = vld [vmem:[%s1 + $0x20] sm:$0xff]
    %v63 = vld [vmem:[%s1 + $0x28] sm:$0xff]
    %v64 = vld [vmem:[%s1 + $0x30] sm:$0xff]
    %v65 = vld [vmem:[%s1 + $0x38] sm:$0xff]
    %v66 = vld [vmem:[%s1 + $0x40] sm:$0xff]
    %v67 = vld [vmem:[%s1 + $0x48] sm:$0xff]
    %v68 = vld [vmem:[%s1 + $0x50] sm:$0xff]
    %v69 = vld [vmem:[%s1 + $0x58] sm:$0xff]
    %v70 = vld [vmem:[%s1 + $0x60] sm:$0xff]
    %v71 = vld [vmem:[%s1 + $0x68] sm:$0xff]
    %v72 = vld [vmem:[%s1 + $0x70] sm:$0xff]
    %v73 = vld [vmem:[%s1 + $0x78] sm:$0xff]
    %v74 = vld [vmem:[%s1 + $0x80] sm:$0xff]
    %v75 = vld [vmem:[%s1 + $0x88] sm:$0xff]
    %v76 = vld [vmem:[%s1 + $0x90] sm:$0xff]
    %v77 = vld [vmem:[%s1 + $0x98] sm:$0xff]
    %v78 = vld [vmem:[%s1 + $0xa0] sm:$0xff]
    %v79 = vld [vmem:[%s1 + $0xa8] sm:$0xff]
    %v80 = vld [vmem:[%s1 + $0xb0] sm:$0xff]
    %v81 = vld [vmem:[%s1 + $0xb8] sm:$0xff]
    %v82 = vld [vmem:[%s1 + $0xc0] sm:$0xff]
    %v83 = vld [vmem:[%s1 + $0xc8] sm:$0xff]
    %v84 = vld [vmem:[%s1 + $0xd0] sm:$0xff]
    %v85 = vld [vmem:[%s1 + $0xd8] sm:$0xff]
    %v86 = vld [vmem:[%s1 + $0xe0] sm:$0xff]
    %v87 = vld [vmem:[%s1 + $0xe8] sm:$0xff]
    %v88 = vld [vmem:[%s1 + $0xf0] sm:$0xff]
    %v89 = vld [vmem:[%s1 + $0xf8] sm:$0xff]
    %v90 = vld [vmem:[#allocation2] sm:$0x3]
    %v91 = vld [vmem:[#allocation5] sm:$0x3]
    %v92 = vld [vmem:[%s0] sm:$0xff]
    %v93 = vld [vmem:[%s0 + $0x8] sm:$0xff]
    %v94 = vld [vmem:[%s0 + $0x10] sm:$0xff]
    %v95 = vld [vmem:[%s0 + $0x18] sm:$0xff]
    %v96 = vld [vmem:[%s0 + $0x20] sm:$0xff]
    %v97 = vld [vmem:[%s0 + $0x28] sm:$0xff]
    %v98 = vld [vmem:[%s0 + $0x30] sm:$0xff]
    %v99 = vld [vmem:[%s0 + $0x38] sm:$0xff]
    %v100 = vld [vmem:[%s0 + $0x40] sm:$0xff]
    %v101 = vld [vmem:[%s0 + $0x48] sm:$0xff]
    %v102 = vld [vmem:[%s0 + $0x50] sm:$0xff]
    %v103 = vld [vmem:[%s0 + $0x58] sm:$0xff]
    %v104 = vld [vmem:[%s0 + $0x60] sm:$0xff]
    %v105 = vld [vmem:[%s0 + $0x68] sm:$0xff]
    %v106 = vld [vmem:[%s0 + $0x70] sm:$0xff]
    %v107 = vld [vmem:[%s0 + $0x78] sm:$0xff]
    %v108 = vld [vmem:[%s2] sm:$0xff]
    %v109 = vld [vmem:[%s2 + $0x8] sm:$0xff]
    %v110 = vld [vmem:[%s2 + $0x10] sm:$0xff]
    %v111 = vld [vmem:[%s2 + $0x18] sm:$0xff]
    %v112 = vld [vmem:[%s2 + $0x20] sm:$0xff]
    %v113 = vld [vmem:[%s2 + $0x28] sm:$0xff]
    %v114 = vld [vmem:[%s2 + $0x30] sm:$0xff]
    %v115 = vld [vmem:[%s2 + $0x38] sm:$0xff]
    %v116 = vld [vmem:[%s2 + $0x40] sm:$0xff]
    %v117 = vld [vmem:[%s2 + $0x48] sm:$0xff]
    %v118 = vld [vmem:[%s2 + $0x50] sm:$0xff]
    %v119 = vld [vmem:[%s2 + $0x58] sm:$0xff]
    %v120 = vld [vmem:[%s2 + $0x60] sm:$0xff]
    %v121 = vld [vmem:[%s2 + $0x68] sm:$0xff]
    %v122 = vld [vmem:[%s2 + $0x70] sm:$0xff]
    %v123 = vld [vmem:[%s2 + $0x78] sm:$0xff]
    %v124 = vld [vmem:[%s4] sm:$0xff]
    %v125 = vld [vmem:[%s4 + $0x8] sm:$0xff]
    %v126 = vld [vmem:[%s4 + $0x10] sm:$0xff]
    %v127 = vld [vmem:[%s4 + $0x18] sm:$0xff]
    %v128 = vld [vmem:[%s4 + $0x20] sm:$0xff]
    %v129 = vld [vmem:[%s4 + $0x28] sm:$0xff]
    %v130 = vld [vmem:[%s4 + $0x30] sm:$0xff]
    %v131 = vld [vmem:[%s4 + $0x38] sm:$0xff]
    %v132 = vld [vmem:[%s4 + $0x40] sm:$0xff]
    %v133 = vld [vmem:[%s4 + $0x48] sm:$0xff]
    %v134 = vld [vmem:[%s4 + $0x50] sm:$0xff]
    %v135 = vld [vmem:[%s4 + $0x58] sm:$0xff]
    %v136 = vld [vmem:[%s4 + $0x60] sm:$0xff]
    %v137 = vld [vmem:[%s4 + $0x68] sm:$0xff]
    %v138 = vld [vmem:[%s4 + $0x70] sm:$0xff]
    %v139 = vld [vmem:[%s4 + $0x78] sm:$0xff]
    %140 = vmatpush.xpose.msra.mxu0 %v73
    %141 = vmatpush.xpose.msra.mxu0 %v72
    %142 = vmatpush.xpose.msra.mxu0 %v71
    %143 = vmatpush.xpose.msra.mxu0 %v70
    %144 = vmatpush.xpose.msra.mxu0 %v69
    %145 = vmatpush.xpose.msra.mxu0 %v68
    %146 = vmatpush.xpose.msra.mxu0 %v67
    %147 = vmatpush.xpose.msra.mxu0 %v66
    %148 = vmatpush.xpose.msra.mxu0 %v65
    %149 = vmatpush.xpose.msra.mxu0 %v64
    %150 = vmatpush.xpose.msra.mxu0 %v63
    %151 = vmatpush.xpose.msra.mxu0 %v62
    %152 = vmatpush.xpose.msra.mxu0 %v61
    %153 = vmatpush.xpose.msra.mxu0 %v60
    %154 = vmatpush.xpose.msra.mxu0 %v59
    %155 = vmatpush.xpose.msra.mxu0 %v58
    %156 = vmatmul.f32.gmra.mxu0 %v92
    %v157 = vpop.f32.mrf.mxu0
    %v158 = vadd.f32 0.0, %v157
    %159 = vmatmul.f32.gmra.mxu0 %v93
    %v160 = vpop.f32.mrf.mxu0
    %v161 = vadd.f32 0.0, %v160
    %162 = vmatmul.f32.gmra.mxu0 %v94
    %v163 = vpop.f32.mrf.mxu0
    %v164 = vadd.f32 0.0, %v163
    %165 = vmatmul.f32.gmra.mxu0 %v95
    %v166 = vpop.f32.mrf.mxu0
    %v167 = vadd.f32 0.0, %v166
    %168 = vmatmul.f32.gmra.mxu0 %v96
    %v169 = vpop.f32.mrf.mxu0
    %v170 = vadd.f32 0.0, %v169
    %171 = vmatmul.f32.gmra.mxu0 %v97
    %v172 = vpop.f32.mrf.mxu0
    %v173 = vadd.f32 0.0, %v172
    %174 = vmatmul.f32.gmra.mxu0 %v98
    %v175 = vpop.f32.mrf.mxu0
    %v176 = vadd.f32 0.0, %v175
    %177 = vmatmul.f32.gmra.mxu0 %v99
    %v178 = vpop.f32.mrf.mxu0
    %v179 = vadd.f32 0.0, %v178
    %180 = vmatmul.f32.gmra.mxu0 %v100
    %v181 = vpop.f32.mrf.mxu0
    %v182 = vadd.f32 0.0, %v181
    %183 = vmatmul.f32.gmra.mxu0 %v101
    %v184 = vpop.f32.mrf.mxu0
    %v185 = vadd.f32 0.0, %v184
    %186 = vmatmul.f32.gmra.mxu0 %v102
    %v187 = vpop.f32.mrf.mxu0
    %v188 = vadd.f32 0.0, %v187
    %189 = vmatmul.f32.gmra.mxu0 %v103
    %v190 = vpop.f32.mrf.mxu0
    %v191 = vadd.f32 0.0, %v190
    %192 = vmatmul.f32.gmra.mxu0 %v104
    %v193 = vpop.f32.mrf.mxu0
    %v194 = vadd.f32 0.0, %v193
    %195 = vmatmul.f32.gmra.mxu0 %v105
    %v196 = vpop.f32.mrf.mxu0
    %v197 = vadd.f32 0.0, %v196
    %198 = vmatmul.f32.gmra.mxu0 %v106
    %v199 = vpop.f32.mrf.mxu0
    %v200 = vadd.f32 0.0, %v199
    %201 = vmatmul.f32.gmra.mxu0 %v107
    %v202 = vpop.f32.mrf.mxu0
    %v203 = vadd.f32 0.0, %v202
    %204 = vdwg.mxu0
    %205 = vmatpush.xpose.msra.mxu0 %v89
    %206 = vmatpush.xpose.msra.mxu0 %v88
    %207 = vmatpush.xpose.msra.mxu0 %v87
    %208 = vmatpush.xpose.msra.mxu0 %v86
    %209 = vmatpush.xpose.msra.mxu0 %v85
    %210 = vmatpush.xpose.msra.mxu0 %v84
    %211 = vmatpush.xpose.msra.mxu0 %v83
    %212 = vmatpush.xpose.msra.mxu0 %v82
    %213 = vmatpush.xpose.msra.mxu0 %v81
    %214 = vmatpush.xpose.msra.mxu0 %v80
    %215 = vmatpush.xpose.msra.mxu0 %v79
    %216 = vmatpush.xpose.msra.mxu0 %v78
    %217 = vmatpush.xpose.msra.mxu0 %v77
    %218 = vmatpush.xpose.msra.mxu0 %v76
    %219 = vmatpush.xpose.msra.mxu0 %v75
    %220 = vmatpush.xpose.msra.mxu0 %v74
    %221 = vmatmul.f32.gmra.mxu0 %v92
    %v222 = vpop.f32.mrf.mxu0
    %v223 = vadd.f32 0.0, %v222
    %224 = vmatmul.f32.gmra.mxu0 %v93
    %v225 = vpop.f32.mrf.mxu0
    %v226 = vadd.f32 0.0, %v225
    %227 = vmatmul.f32.gmra.mxu0 %v94
    %v228 = vpop.f32.mrf.mxu0
    %v229 = vadd.f32 0.0, %v228
    %230 = vmatmul.f32.gmra.mxu0 %v95
    %v231 = vpop.f32.mrf.mxu0
    %v232 = vadd.f32 0.0, %v231
    %233 = vmatmul.f32.gmra.mxu0 %v96
    %v234 = vpop.f32.mrf.mxu0
    %v235 = vadd.f32 0.0, %v234
    %236 = vmatmul.f32.gmra.mxu0 %v97
    %v237 = vpop.f32.mrf.mxu0
    %v238 = vadd.f32 0.0, %v237
    %239 = vmatmul.f32.gmra.mxu0 %v98
    %v240 = vpop.f32.mrf.mxu0
    %v241 = vadd.f32 0.0, %v240
    %242 = vmatmul.f32.gmra.mxu0 %v99
    %v243 = vpop.f32.mrf.mxu0
    %v244 = vadd.f32 0.0, %v243
    %245 = vmatmul.f32.gmra.mxu0 %v100
    %v246 = vpop.f32.mrf.mxu0
    %v247 = vadd.f32 0.0, %v246
    %248 = vmatmul.f32.gmra.mxu0 %v101
    %v249 = vpop.f32.mrf.mxu0
    %v250 = vadd.f32 0.0, %v249
    %251 = vmatmul.f32.gmra.mxu0 %v102
    %v252 = vpop.f32.mrf.mxu0
    %v253 = vadd.f32 0.0, %v252
    %254 = vmatmul.f32.gmra.mxu0 %v103
    %v255 = vpop.f32.mrf.mxu0
    %v256 = vadd.f32 0.0, %v255
    %257 = vmatmul.f32.gmra.mxu0 %v104
    %v258 = vpop.f32.mrf.mxu0
    %v259 = vadd.f32 0.0, %v258
    %260 = vmatmul.f32.gmra.mxu0 %v105
    %v261 = vpop.f32.mrf.mxu0
    %v262 = vadd.f32 0.0, %v261
    %263 = vmatmul.f32.gmra.mxu0 %v106
    %v264 = vpop.f32.mrf.mxu0
    %v265 = vadd.f32 0.0, %v264
    %266 = vmatmul.f32.gmra.mxu0 %v107
    %v267 = vpop.f32.mrf.mxu0
    %v268 = vadd.f32 0.0, %v267
    %269 = vdwg.mxu0
    %271 = vset.pattern.permute.xlu0 0
    %272 = vperm.xlu0 %271, %v108
    %v273 = vpop.permute.xlu0 %272
    %276 = vset.pattern.permute.xlu0 0
    %277 = vperm.xlu0 %276, %v109
    %v278 = vpop.permute.xlu0 %277
    %281 = vset.pattern.permute.xlu0 0
    %282 = vperm.xlu0 %281, %v110
    %v283 = vpop.permute.xlu0 %282
    %286 = vset.pattern.permute.xlu0 0
    %287 = vperm.xlu0 %286, %v111
    %v288 = vpop.permute.xlu0 %287
    %291 = vset.pattern.permute.xlu0 0
    %292 = vperm.xlu0 %291, %v112
    %v293 = vpop.permute.xlu0 %292
    %296 = vset.pattern.permute.xlu0 0
    %297 = vperm.xlu0 %296, %v113
    %v298 = vpop.permute.xlu0 %297
    %301 = vset.pattern.permute.xlu0 0
    %302 = vperm.xlu0 %301, %v114
    %v303 = vpop.permute.xlu0 %302
    %306 = vset.pattern.permute.xlu0 0
    %307 = vperm.xlu0 %306, %v115
    %v308 = vpop.permute.xlu0 %307
    %311 = vset.pattern.permute.xlu0 0
    %312 = vperm.xlu0 %311, %v116
    %v313 = vpop.permute.xlu0 %312
    %316 = vset.pattern.permute.xlu0 0
    %317 = vperm.xlu0 %316, %v117
    %v318 = vpop.permute.xlu0 %317
    %321 = vset.pattern.permute.xlu0 0
    %322 = vperm.xlu0 %321, %v118
    %v323 = vpop.permute.xlu0 %322
    %326 = vset.pattern.permute.xlu0 0
    %327 = vperm.xlu0 %326, %v119
    %v328 = vpop.permute.xlu0 %327
    %331 = vset.pattern.permute.xlu0 0
    %332 = vperm.xlu0 %331, %v120
    %v333 = vpop.permute.xlu0 %332
    %336 = vset.pattern.permute.xlu0 0
    %337 = vperm.xlu0 %336, %v121
    %v338 = vpop.permute.xlu0 %337
    %341 = vset.pattern.permute.xlu0 0
    %342 = vperm.xlu0 %341, %v122
    %v343 = vpop.permute.xlu0 %342
    %346 = vset.pattern.permute.xlu0 0
    %347 = vperm.xlu0 %346, %v123
    %v348 = vpop.permute.xlu0 %347
    %v351 = vperm.slane %v90, 0
    %v352 = vperm.slane %v90, 1
    %v355 = vadd.f32 %v273, %v351
    %v356 = vadd.f32 %v273, %v352
    %v357 = vadd.f32 %v278, %v351
    %v358 = vadd.f32 %v278, %v352
    %v359 = vadd.f32 %v283, %v351
    %v360 = vadd.f32 %v283, %v352
    %v361 = vadd.f32 %v288, %v351
    %v362 = vadd.f32 %v288, %v352
    %v363 = vadd.f32 %v293, %v351
    %v364 = vadd.f32 %v293, %v352
    %v365 = vadd.f32 %v298, %v351
    %v366 = vadd.f32 %v298, %v352
    %v367 = vadd.f32 %v303, %v351
    %v368 = vadd.f32 %v303, %v352
    %v369 = vadd.f32 %v308, %v351
    %v370 = vadd.f32 %v308, %v352
    %v371 = vadd.f32 %v313, %v351
    %v372 = vadd.f32 %v313, %v352
    %v373 = vadd.f32 %v318, %v351
    %v374 = vadd.f32 %v318, %v352
    %v375 = vadd.f32 %v323, %v351
    %v376 = vadd.f32 %v323, %v352
    %v377 = vadd.f32 %v328, %v351
    %v378 = vadd.f32 %v328, %v352
    %v379 = vadd.f32 %v333, %v351
    %v380 = vadd.f32 %v333, %v352
    %v381 = vadd.f32 %v338, %v351
    %v382 = vadd.f32 %v338, %v352
    %v383 = vadd.f32 %v343, %v351
    %v384 = vadd.f32 %v343, %v352
    %v385 = vadd.f32 %v348, %v351
    %v386 = vadd.f32 %v348, %v352
    %v387 = vmul.f32 %v158, 2.0
    %v388 = vmul.f32 %v223, 2.0
    %v389 = vmul.f32 %v161, 2.0
    %v390 = vmul.f32 %v226, 2.0
    %v391 = vmul.f32 %v164, 2.0
    %v392 = vmul.f32 %v229, 2.0
    %v393 = vmul.f32 %v167, 2.0
    %v394 = vmul.f32 %v232, 2.0
    %v395 = vmul.f32 %v170, 2.0
    %v396 = vmul.f32 %v235, 2.0
    %v397 = vmul.f32 %v173, 2.0
    %v398 = vmul.f32 %v238, 2.0
    %v399 = vmul.f32 %v176, 2.0
    %v400 = vmul.f32 %v241, 2.0
    %v401 = vmul.f32 %v179, 2.0
    %v402 = vmul.f32 %v244, 2.0
    %v403 = vmul.f32 %v182, 2.0
    %v404 = vmul.f32 %v247, 2.0
    %v405 = vmul.f32 %v185, 2.0
    %v406 = vmul.f32 %v250, 2.0
    %v407 = vmul.f32 %v188, 2.0
    %v408 = vmul.f32 %v253, 2.0
    %v409 = vmul.f32 %v191, 2.0
    %v410 = vmul.f32 %v256, 2.0
    %v411 = vmul.f32 %v194, 2.0
    %v412 = vmul.f32 %v259, 2.0
    %v413 = vmul.f32 %v197, 2.0
    %v414 = vmul.f32 %v262, 2.0
    %v415 = vmul.f32 %v200, 2.0
    %v416 = vmul.f32 %v265, 2.0
    %v417 = vmul.f32 %v203, 2.0
    %v418 = vmul.f32 %v268, 2.0
    %v419 = vsub.f32 %v355, %v387
    %v420 = vsub.f32 %v356, %v388
    %v421 = vsub.f32 %v357, %v389
    %v422 = vsub.f32 %v358, %v390
    %v423 = vsub.f32 %v359, %v391
    %v424 = vsub.f32 %v360, %v392
    %v425 = vsub.f32 %v361, %v393
    %v426 = vsub.f32 %v362, %v394
    %v427 = vsub.f32 %v363, %v395
    %v428 = vsub.f32 %v364, %v396
    %v429 = vsub.f32 %v365, %v397
    %v430 = vsub.f32 %v366, %v398
    %v431 = vsub.f32 %v367, %v399
    %v432 = vsub.f32 %v368, %v400
    %v433 = vsub.f32 %v369, %v401
    %v434 = vsub.f32 %v370, %v402
    %v435 = vsub.f32 %v371, %v403
    %v436 = vsub.f32 %v372, %v404
    %v437 = vsub.f32 %v373, %v405
    %v438 = vsub.f32 %v374, %v406
    %v439 = vsub.f32 %v375, %v407
    %v440 = vsub.f32 %v376, %v408
    %v441 = vsub.f32 %v377, %v409
    %v442 = vsub.f32 %v378, %v410
    %v443 = vsub.f32 %v379, %v411
    %v444 = vsub.f32 %v380, %v412
    %v445 = vsub.f32 %v381, %v413
    %v446 = vsub.f32 %v382, %v414
    %v447 = vsub.f32 %v383, %v415
    %v448 = vsub.f32 %v384, %v416
    %v449 = vsub.f32 %v385, %v417
    %v450 = vsub.f32 %v386, %v418
    %v451 = vmax.f32 %v419, 0.0
    %v452 = vmax.f32 %v420, 0.0
    %v453 = vmax.f32 %v421, 0.0
    %v454 = vmax.f32 %v422, 0.0
    %v455 = vmax.f32 %v423, 0.0
    %v456 = vmax.f32 %v424, 0.0
    %v457 = vmax.f32 %v425, 0.0
    %v458 = vmax.f32 %v426, 0.0
    %v459 = vmax.f32 %v427, 0.0
    %v460 = vmax.f32 %v428, 0.0
    %v461 = vmax.f32 %v429, 0.0
    %v462 = vmax.f32 %v430, 0.0
    %v463 = vmax.f32 %v431, 0.0
    %v464 = vmax.f32 %v432, 0.0
    %v465 = vmax.f32 %v433, 0.0
    %v466 = vmax.f32 %v434, 0.0
    %v467 = vmax.f32 %v435, 0.0
    %v468 = vmax.f32 %v436, 0.0
    %v469 = vmax.f32 %v437, 0.0
    %v470 = vmax.f32 %v438, 0.0
    %v471 = vmax.f32 %v439, 0.0
    %v472 = vmax.f32 %v440, 0.0
    %v473 = vmax.f32 %v441, 0.0
    %v474 = vmax.f32 %v442, 0.0
    %v475 = vmax.f32 %v443, 0.0
    %v476 = vmax.f32 %v444, 0.0
    %v477 = vmax.f32 %v445, 0.0
    %v478 = vmax.f32 %v446, 0.0
    %v479 = vmax.f32 %v447, 0.0
    %v480 = vmax.f32 %v448, 0.0
    %v481 = vmax.f32 %v449, 0.0
    %v482 = vmax.f32 %v450, 0.0
    %483 = vset.pattern.permute.xlu0 0
    %484 = vperm.xlu0 %483, %v124
    %v485 = vpop.permute.xlu0 %484
    %486 = vset.pattern.permute.xlu0 0
    %487 = vperm.xlu0 %486, %v125
    %v488 = vpop.permute.xlu0 %487
    %489 = vset.pattern.permute.xlu0 0
    %490 = vperm.xlu0 %489, %v126
    %v491 = vpop.permute.xlu0 %490
    %492 = vset.pattern.permute.xlu0 0
    %493 = vperm.xlu0 %492, %v127
    %v494 = vpop.permute.xlu0 %493
    %495 = vset.pattern.permute.xlu0 0
    %496 = vperm.xlu0 %495, %v128
    %v497 = vpop.permute.xlu0 %496
    %498 = vset.pattern.permute.xlu0 0
    %499 = vperm.xlu0 %498, %v129
    %v500 = vpop.permute.xlu0 %499
    %501 = vset.pattern.permute.xlu0 0
    %502 = vperm.xlu0 %501, %v130
    %v503 = vpop.permute.xlu0 %502
    %504 = vset.pattern.permute.xlu0 0
    %505 = vperm.xlu0 %504, %v131
    %v506 = vpop.permute.xlu0 %505
    %507 = vset.pattern.permute.xlu0 0
    %508 = vperm.xlu0 %507, %v132
    %v509 = vpop.permute.xlu0 %508
    %510 = vset.pattern.permute.xlu0 0
    %511 = vperm.xlu0 %510, %v133
    %v512 = vpop.permute.xlu0 %511
    %513 = vset.pattern.permute.xlu0 0
    %514 = vperm.xlu0 %513, %v134
    %v515 = vpop.permute.xlu0 %514
    %516 = vset.pattern.permute.xlu0 0
    %517 = vperm.xlu0 %516, %v135
    %v518 = vpop.permute.xlu0 %517
    %519 = vset.pattern.permute.xlu0 0
    %520 = vperm.xlu0 %519, %v136
    %v521 = vpop.permute.xlu0 %520
    %522 = vset.pattern.permute.xlu0 0
    %523 = vperm.xlu0 %522, %v137
    %v524 = vpop.permute.xlu0 %523
    %525 = vset.pattern.permute.xlu0 0
    %526 = vperm.xlu0 %525, %v138
    %v527 = vpop.permute.xlu0 %526
    %528 = vset.pattern.permute.xlu0 0
    %529 = vperm.xlu0 %528, %v139
    %v530 = vpop.permute.xlu0 %529
    %v531 = vperm.slane %v91, 0
    %v532 = vperm.slane %v91, 1
    %vm533 = vcmp.eq.s32.totalorder %v485, %v531
    %vm534 = vcmp.eq.s32.totalorder %v485, %v532
    %vm535 = vcmp.eq.s32.totalorder %v488, %v531
    %vm536 = vcmp.eq.s32.totalorder %v488, %v532
    %vm537 = vcmp.eq.s32.totalorder %v491, %v531
    %vm538 = vcmp.eq.s32.totalorder %v491, %v532
    %vm539 = vcmp.eq.s32.totalorder %v494, %v531
    %vm540 = vcmp.eq.s32.totalorder %v494, %v532
    %vm541 = vcmp.eq.s32.totalorder %v497, %v531
    %vm542 = vcmp.eq.s32.totalorder %v497, %v532
    %vm543 = vcmp.eq.s32.totalorder %v500, %v531
    %vm544 = vcmp.eq.s32.totalorder %v500, %v532
    %vm545 = vcmp.eq.s32.totalorder %v503, %v531
    %vm546 = vcmp.eq.s32.totalorder %v503, %v532
    %vm547 = vcmp.eq.s32.totalorder %v506, %v531
    %vm548 = vcmp.eq.s32.totalorder %v506, %v532
    %vm549 = vcmp.eq.s32.totalorder %v509, %v531
    %vm550 = vcmp.eq.s32.totalorder %v509, %v532
    %vm551 = vcmp.eq.s32.totalorder %v512, %v531
    %vm552 = vcmp.eq.s32.totalorder %v512, %v532
    %vm553 = vcmp.eq.s32.totalorder %v515, %v531
    %vm554 = vcmp.eq.s32.totalorder %v515, %v532
    %vm555 = vcmp.eq.s32.totalorder %v518, %v531
    %vm556 = vcmp.eq.s32.totalorder %v518, %v532
    %vm557 = vcmp.eq.s32.totalorder %v521, %v531
    %vm558 = vcmp.eq.s32.totalorder %v521, %v532
    %vm559 = vcmp.eq.s32.totalorder %v524, %v531
    %vm560 = vcmp.eq.s32.totalorder %v524, %v532
    %vm561 = vcmp.eq.s32.totalorder %v527, %v531
    %vm562 = vcmp.eq.s32.totalorder %v527, %v532
    %vm563 = vcmp.eq.s32.totalorder %v530, %v531
    %vm564 = vcmp.eq.s32.totalorder %v530, %v532
    %v565 = vsel %vm533, %v451, 0.0
    %v566 = vsel %vm534, %v452, 0.0
    %v567 = vsel %vm535, %v453, 0.0
    %v568 = vsel %vm536, %v454, 0.0
    %v569 = vsel %vm537, %v455, 0.0
    %v570 = vsel %vm538, %v456, 0.0
    %v571 = vsel %vm539, %v457, 0.0
    %v572 = vsel %vm540, %v458, 0.0
    %v573 = vsel %vm541, %v459, 0.0
    %v574 = vsel %vm542, %v460, 0.0
    %v575 = vsel %vm543, %v461, 0.0
    %v576 = vsel %vm544, %v462, 0.0
    %v577 = vsel %vm545, %v463, 0.0
    %v578 = vsel %vm546, %v464, 0.0
    %v579 = vsel %vm547, %v465, 0.0
    %v580 = vsel %vm548, %v466, 0.0
    %v581 = vsel %vm549, %v467, 0.0
    %v582 = vsel %vm550, %v468, 0.0
    %v583 = vsel %vm551, %v469, 0.0
    %v584 = vsel %vm552, %v470, 0.0
    %v585 = vsel %vm553, %v471, 0.0
    %v586 = vsel %vm554, %v472, 0.0
    %v587 = vsel %vm555, %v473, 0.0
    %v588 = vsel %vm556, %v474, 0.0
    %v589 = vsel %vm557, %v475, 0.0
    %v590 = vsel %vm558, %v476, 0.0
    %v591 = vsel %vm559, %v477, 0.0
    %v592 = vsel %vm560, %v478, 0.0
    %v593 = vsel %vm561, %v479, 0.0
    %v594 = vsel %vm562, %v480, 0.0
    %v595 = vsel %vm563, %v481, 0.0
    %v596 = vsel %vm564, %v482, 0.0
    %v597 = vmax.f32 %v565, %v569
    %v598 = vmax.f32 %v567, %v571
    %v599 = vmax.f32 %v597, %v573
    %v600 = vmax.f32 %v598, %v575
    %v601 = vmax.f32 %v599, %v577
    %v602 = vmax.f32 %v600, %v579
    %v603 = vmax.f32 %v601, %v581
    %v604 = vmax.f32 %v602, %v583
    %v605 = vmax.f32 %v603, %v585
    %v606 = vmax.f32 %v604, %v587
    %v607 = vmax.f32 %v605, %v589
    %v608 = vmax.f32 %v606, %v591
    %v609 = vmax.f32 %v607, %v593
    %v610 = vmax.f32 %v608, %v595
    %v611 = vmax.f32 %v609, %v610
    %v612 = vrot.slane %v611, 4
    %v613 = vmax.f32 %v611, %v612
    %v614 = vrot.slane %v613, 2
    %v615 = vmax.f32 %v613, %v614
    %v616 = vrot.slane %v615, 1
    %v617 = vmax.f32 %v615, %v616
    %v618 = vmax.f32 %v566, %v570
    %v619 = vmax.f32 %v568, %v572
    %v620 = vmax.f32 %v618, %v574
    %v621 = vmax.f32 %v619, %v576
    %v622 = vmax.f32 %v620, %v578
    %v623 = vmax.f32 %v621, %v580
    %v624 = vmax.f32 %v622, %v582
    %v625 = vmax.f32 %v623, %v584
    %v626 = vmax.f32 %v624, %v586
    %v627 = vmax.f32 %v625, %v588
    %v628 = vmax.f32 %v626, %v590
    %v629 = vmax.f32 %v627, %v592
    %v630 = vmax.f32 %v628, %v594
    %v631 = vmax.f32 %v629, %v596
    %v632 = vmax.f32 %v630, %v631
    %v633 = vrot.slane %v632, 4
    %v634 = vmax.f32 %v632, %v633
    %v635 = vrot.slane %v634, 2
    %v636 = vmax.f32 %v634, %v635
    %v637 = vrot.slane %v636, 1
    %v638 = vmax.f32 %v636, %v637
    %v639 = vmax.f32 %v617, 0.0
    %v640 = vmax.f32 %v638, 0.0
    %v641 = vsel %vm533, %v451, 1e+30
    %v642 = vsel %vm534, %v452, 1e+30
    %v643 = vsel %vm535, %v453, 1e+30
    %v644 = vsel %vm536, %v454, 1e+30
    %v645 = vsel %vm537, %v455, 1e+30
    %v646 = vsel %vm538, %v456, 1e+30
    %v647 = vsel %vm539, %v457, 1e+30
    %v648 = vsel %vm540, %v458, 1e+30
    %v649 = vsel %vm541, %v459, 1e+30
    %v650 = vsel %vm542, %v460, 1e+30
    %v651 = vsel %vm543, %v461, 1e+30
    %v652 = vsel %vm544, %v462, 1e+30
    %v653 = vsel %vm545, %v463, 1e+30
    %v654 = vsel %vm546, %v464, 1e+30
    %v655 = vsel %vm547, %v465, 1e+30
    %v656 = vsel %vm548, %v466, 1e+30
    %v657 = vsel %vm549, %v467, 1e+30
    %v658 = vsel %vm550, %v468, 1e+30
    %v659 = vsel %vm551, %v469, 1e+30
    %v660 = vsel %vm552, %v470, 1e+30
    %v661 = vsel %vm553, %v471, 1e+30
    %v662 = vsel %vm554, %v472, 1e+30
    %v663 = vsel %vm555, %v473, 1e+30
    %v664 = vsel %vm556, %v474, 1e+30
    %v665 = vsel %vm557, %v475, 1e+30
    %v666 = vsel %vm558, %v476, 1e+30
    %v667 = vsel %vm559, %v477, 1e+30
    %v668 = vsel %vm560, %v478, 1e+30
    %v669 = vsel %vm561, %v479, 1e+30
    %v670 = vsel %vm562, %v480, 1e+30
    %v671 = vsel %vm563, %v481, 1e+30
    %v672 = vsel %vm564, %v482, 1e+30
    %v673 = vmin.f32 %v641, %v645
    %v674 = vmin.f32 %v643, %v647
    %v675 = vmin.f32 %v673, %v649
    %v676 = vmin.f32 %v674, %v651
    %v677 = vmin.f32 %v675, %v653
    %v678 = vmin.f32 %v676, %v655
    %v679 = vmin.f32 %v677, %v657
    %v680 = vmin.f32 %v678, %v659
    %v681 = vmin.f32 %v679, %v661
    %v682 = vmin.f32 %v680, %v663
    %v683 = vmin.f32 %v681, %v665
    %v684 = vmin.f32 %v682, %v667
    %v685 = vmin.f32 %v683, %v669
    %v686 = vmin.f32 %v684, %v671
    %v687 = vmin.f32 %v685, %v686
    %v688 = vrot.slane %v687, 4
    %v689 = vmin.f32 %v687, %v688
    %v690 = vrot.slane %v689, 2
    %v691 = vmin.f32 %v689, %v690
    %v692 = vrot.slane %v691, 1
    %v693 = vmin.f32 %v691, %v692
    %v694 = vmin.f32 %v642, %v646
    %v695 = vmin.f32 %v644, %v648
    %v696 = vmin.f32 %v694, %v650
    %v697 = vmin.f32 %v695, %v652
    %v698 = vmin.f32 %v696, %v654
    %v699 = vmin.f32 %v697, %v656
    %v700 = vmin.f32 %v698, %v658
    %v701 = vmin.f32 %v699, %v660
    %v702 = vmin.f32 %v700, %v662
    %v703 = vmin.f32 %v701, %v664
    %v704 = vmin.f32 %v702, %v666
    %v705 = vmin.f32 %v703, %v668
    %v706 = vmin.f32 %v704, %v670
    %v707 = vmin.f32 %v705, %v672
    %v708 = vmin.f32 %v706, %v707
    %v709 = vrot.slane %v708, 4
    %v710 = vmin.f32 %v708, %v709
    %v711 = vrot.slane %v710, 2
    %v712 = vmin.f32 %v710, %v711
    %v713 = vrot.slane %v712, 1
    %v714 = vmin.f32 %v712, %v713
    %v715 = vmin.f32 %v693, 1e+30
    %v716 = vmin.f32 %v714, 1e+30
    %v717 = vsel %vm533, 1e+30, %v451
    %v718 = vsel %vm534, 1e+30, %v452
    %v719 = vsel %vm535, 1e+30, %v453
    %v720 = vsel %vm536, 1e+30, %v454
    %v721 = vsel %vm537, 1e+30, %v455
    %v722 = vsel %vm538, 1e+30, %v456
    %v723 = vsel %vm539, 1e+30, %v457
    %v724 = vsel %vm540, 1e+30, %v458
    %v725 = vsel %vm541, 1e+30, %v459
    %v726 = vsel %vm542, 1e+30, %v460
    %v727 = vsel %vm543, 1e+30, %v461
    %v728 = vsel %vm544, 1e+30, %v462
    %v729 = vsel %vm545, 1e+30, %v463
    %v730 = vsel %vm546, 1e+30, %v464
    %v731 = vsel %vm547, 1e+30, %v465
    %v732 = vsel %vm548, 1e+30, %v466
    %v733 = vsel %vm549, 1e+30, %v467
    %v734 = vsel %vm550, 1e+30, %v468
    %v735 = vsel %vm551, 1e+30, %v469
    %v736 = vsel %vm552, 1e+30, %v470
    %v737 = vsel %vm553, 1e+30, %v471
    %v738 = vsel %vm554, 1e+30, %v472
    %v739 = vsel %vm555, 1e+30, %v473
    %v740 = vsel %vm556, 1e+30, %v474
    %v741 = vsel %vm557, 1e+30, %v475
    %v742 = vsel %vm558, 1e+30, %v476
    %v743 = vsel %vm559, 1e+30, %v477
    %v744 = vsel %vm560, 1e+30, %v478
    %v745 = vsel %vm561, 1e+30, %v479
    %v746 = vsel %vm562, 1e+30, %v480
    %v747 = vsel %vm563, 1e+30, %v481
    %v748 = vsel %vm564, 1e+30, %v482
    %v749 = vmin.f32 %v717, %v721
    %v750 = vmin.f32 %v719, %v723
    %v751 = vmin.f32 %v749, %v725
    %v752 = vmin.f32 %v750, %v727
    %v753 = vmin.f32 %v751, %v729
    %v754 = vmin.f32 %v752, %v731
    %v755 = vmin.f32 %v753, %v733
    %v756 = vmin.f32 %v754, %v735
    %v757 = vmin.f32 %v755, %v737
    %v758 = vmin.f32 %v756, %v739
    %v759 = vmin.f32 %v757, %v741
    %v760 = vmin.f32 %v758, %v743
    %v761 = vmin.f32 %v759, %v745
    %v762 = vmin.f32 %v760, %v747
    %v763 = vmin.f32 %v761, %v762
    %v764 = vrot.slane %v763, 4
    %v765 = vmin.f32 %v763, %v764
    %v766 = vrot.slane %v765, 2
    %v767 = vmin.f32 %v765, %v766
    %v768 = vrot.slane %v767, 1
    %v769 = vmin.f32 %v767, %v768
    %v770 = vmin.f32 %v718, %v722
    %v771 = vmin.f32 %v720, %v724
    %v772 = vmin.f32 %v770, %v726
    %v773 = vmin.f32 %v771, %v728
    %v774 = vmin.f32 %v772, %v730
    %v775 = vmin.f32 %v773, %v732
    %v776 = vmin.f32 %v774, %v734
    %v777 = vmin.f32 %v775, %v736
    %v778 = vmin.f32 %v776, %v738
    %v779 = vmin.f32 %v777, %v740
    %v780 = vmin.f32 %v778, %v742
    %v781 = vmin.f32 %v779, %v744
    %v782 = vmin.f32 %v780, %v746
    %v783 = vmin.f32 %v781, %v748
    %v784 = vmin.f32 %v782, %v783
    %v785 = vrot.slane %v784, 4
    %v786 = vmin.f32 %v784, %v785
    %v787 = vrot.slane %v786, 2
    %v788 = vmin.f32 %v786, %v787
    %v789 = vrot.slane %v788, 1
    %v790 = vmin.f32 %v788, %v789
    %v791 = vmin.f32 %v769, 1e+30
    %v792 = vmin.f32 %v790, 1e+30
    %v793 = vadd.f32 %v639, 1e-12
    %v794 = vadd.f32 %v640, 1e-12
    %v795 = vrsqrt.pop %v793
    %v796 = vmul.f32 %v795, %v793
    %v797 = vmul.f32 %v796, %v795
    %v798 = vmul.f32 0.5, %v797
    %v799 = vsub.f32 1.5, %v798
    %v800 = vmul.f32 %v795, %v799
    %v801 = vmul.f32 %v793, %v800
    %vm802 = vcmp.eq.f32.partialorder %v793, inf
    %v803 = vsel %vm802, %v793, %v801
    %vm804 = vcmp.eq.f32.partialorder %v793, 0.0
    %v805 = vand.u32 %v793, 2147483648
    %v806 = vsel %vm804, %v805, %v803
    %v807 = vrsqrt.pop %v794
    %v808 = vmul.f32 %v807, %v794
    %v809 = vmul.f32 %v808, %v807
    %v810 = vmul.f32 0.5, %v809
    %v811 = vsub.f32 1.5, %v810
    %v812 = vmul.f32 %v807, %v811
    %v813 = vmul.f32 %v794, %v812
    %vm814 = vcmp.eq.f32.partialorder %v794, inf
    %v815 = vsel %vm814, %v794, %v813
    %vm816 = vcmp.eq.f32.partialorder %v794, 0.0
    %v817 = vand.u32 %v794, 2147483648
    %v818 = vsel %vm816, %v817, %v815
    %v819 = vadd.f32 %v791, 1e-12
    %v820 = vadd.f32 %v792, 1e-12
    %v821 = vrsqrt.pop %v819
    %v822 = vmul.f32 %v821, %v819
    %v823 = vmul.f32 %v822, %v821
    %v824 = vmul.f32 0.5, %v823
    %v825 = vsub.f32 1.5, %v824
    %v826 = vmul.f32 %v821, %v825
    %v827 = vmul.f32 %v819, %v826
    %vm828 = vcmp.eq.f32.partialorder %v819, inf
    %v829 = vsel %vm828, %v819, %v827
    %vm830 = vcmp.eq.f32.partialorder %v819, 0.0
    %v831 = vand.u32 %v819, 2147483648
    %v832 = vsel %vm830, %v831, %v829
    %v833 = vrsqrt.pop %v820
    %v834 = vmul.f32 %v833, %v820
    %v835 = vmul.f32 %v834, %v833
    %v836 = vmul.f32 0.5, %v835
    %v837 = vsub.f32 1.5, %v836
    %v838 = vmul.f32 %v833, %v837
    %v839 = vmul.f32 %v820, %v838
    %vm840 = vcmp.eq.f32.partialorder %v820, inf
    %v841 = vsel %vm840, %v820, %v839
    %vm842 = vcmp.eq.f32.partialorder %v820, 0.0
    %v843 = vand.u32 %v820, 2147483648
    %v844 = vsel %vm842, %v843, %v841
    %v845 = vadd.f32 %v715, 1e-12
    %v846 = vadd.f32 %v716, 1e-12
    %v847 = vrsqrt.pop %v845
    %v848 = vmul.f32 %v847, %v845
    %v849 = vmul.f32 %v848, %v847
    %v850 = vmul.f32 0.5, %v849
    %v851 = vsub.f32 1.5, %v850
    %v852 = vmul.f32 %v847, %v851
    %v853 = vmul.f32 %v845, %v852
    %vm854 = vcmp.eq.f32.partialorder %v845, inf
    %v855 = vsel %vm854, %v845, %v853
    %vm856 = vcmp.eq.f32.partialorder %v845, 0.0
    %v857 = vand.u32 %v845, 2147483648
    %v858 = vsel %vm856, %v857, %v855
    %v859 = vrsqrt.pop %v846
    %v860 = vmul.f32 %v859, %v846
    %v861 = vmul.f32 %v860, %v859
    %v862 = vmul.f32 0.5, %v861
    %v863 = vsub.f32 1.5, %v862
    %v864 = vmul.f32 %v859, %v863
    %v865 = vmul.f32 %v846, %v864
    %vm866 = vcmp.eq.f32.partialorder %v846, inf
    %v867 = vsel %vm866, %v846, %v865
    %vm868 = vcmp.eq.f32.partialorder %v846, 0.0
    %v869 = vand.u32 %v846, 2147483648
    %v870 = vsel %vm868, %v869, %v867
    %v871 = vadd.f32 %v858, 9999.9
    %v872 = vadd.f32 %v870, 9999.9
    %v873 = vmin.f32 %v832, %v871
    %v874 = vmin.f32 %v844, %v872
    %s875 = smul.u32 0, 256
    %v876 = vlaneseq
    %v877 = vand.u32 %v876, 127
    %v878 = vadd.s32 %v877, 128
    %v879 = vstv %s875
    %v880 = vadd.s32 %v879, %v877
    %v881 = vadd.s32 %v879, %v878
    %v882 = vsub.f32 %v806, %v873
    %v883 = vsub.f32 %v818, %v874
    %v884 = vadd.f32 %v882, 0.2
    %v885 = vadd.f32 %v883, 0.2
    %v886 = vmax.f32 %v884, 0.0
    %v887 = vmax.f32 %v885, 0.0
    %vm888 = vcmp.lt.s32.totalorder %v880, 6
    %vm889 = vcmp.lt.s32.totalorder %v881, 6
    %v890 = vsel %vm888, %v886, 0.0
    %v891 = vsel %vm889, %v887, 0.0
    %v894 = vrot.slane %v891, 7
    %vm895 = vcmask 1040384
    %v896 = vsel %vm895, %v890, %v894
    %v898 = vlaneseq
    %vm899 = vcmp.ge.s32.totalorder %v898, 0
    %vm900 = vcmp.lt.s32.totalorder %v898, 256
    %vm901 = vmand %vm899, %vm900
    %902 = vst.msk [vmem:[#allocation7] sm:$0x3] %vm901, %v896
    %v903 = vld [vmem:[%s6] sm:$0xf]
    %905 = vst [vmem:[#allocation1] ss:$4 sm:$0xff] %v903
    %v906 = vld.sshfl [vmem:[#allocation1] sm:$0xff pattern:$0x73625140]
    %v907 = vld.sshfl [vmem:[#allocation1 + $0x8] sm:$0xff pattern:$0x73625140]
    %vm910 = vcmask 1041408
    %v911 = vsel %vm910, %v906, -inf
    %v912 = vrot.slane %v911, 4
    %v913 = vmax.f32 %v911, %v912
    %v914 = vrot.slane %v913, 2
    %v915 = vmax.f32 %v913, %v914
    %v916 = vrot.slane %v915, 1
    %v917 = vmax.f32 %v915, %v916
    %v918 = vsel %vm910, %v907, -inf
    %v919 = vrot.slane %v918, 4
    %v920 = vmax.f32 %v918, %v919
    %v921 = vrot.slane %v920, 2
    %v922 = vmax.f32 %v920, %v921
    %v923 = vrot.slane %v922, 1
    %v924 = vmax.f32 %v922, %v923
    %v927 = vrot.slane %v924, 6
    %v928 = vsel %vm910, %v917, %v927
    %v930 = vsub.f32 %v903, %v928
    %v931 = vmul.f32 %v930, 1.442695
    %v932 = vpow.pop %v931
    %934 = vst [vmem:[#allocation1] ss:$4 sm:$0xff] %v932
    %v935 = vld.sshfl [vmem:[#allocation1] sm:$0xff pattern:$0x73625140]
    %v936 = vld.sshfl [vmem:[#allocation1 + $0x8] sm:$0xff pattern:$0x73625140]
    %v939 = vsel %vm910, %v935, 0.0
    %v940 = vrot.slane %v939, 4
    %v941 = vadd.f32 %v939, %v940
    %v942 = vrot.slane %v941, 2
    %v943 = vadd.f32 %v941, %v942
    %v944 = vrot.slane %v943, 1
    %v945 = vadd.f32 %v943, %v944
    %v946 = vsel %vm910, %v936, 0.0
    %v947 = vrot.slane %v946, 4
    %v948 = vadd.f32 %v946, %v947
    %v949 = vrot.slane %v948, 2
    %v950 = vadd.f32 %v948, %v949
    %v951 = vrot.slane %v950, 1
    %v952 = vadd.f32 %v950, %v951
    %v953 = vlog2.pop %v945
    %v954 = vmul.f32 %v953, 0.6931472
    %v955 = vlog2.pop %v952
    %v956 = vmul.f32 %v955, 0.6931472
    %v959 = vrot.slane %v956, 6
    %v960 = vsel %vm910, %v954, %v959
    %v962 = vsub.f32 %v930, %v960
    %vm963 = vcmp.ge.s32.totalorder %v880, 6
    %vm964 = vcmp.ge.s32.totalorder %v881, 6
    %v966 = vperm.slane %v962, 1
    %v967 = vperm.slane %v962, 3
    %v970 = vperm.slane %v962, 0
    %v971 = vperm.slane %v962, 2
    %v974 = vsel %vm963, %v966, %v970
    %v975 = vsel %vm964, %v967, %v971
    %vm976 = vcmp.lt.s32.totalorder %v880, 8
    %vm977 = vcmp.lt.s32.totalorder %v881, 8
    %v978 = vsub.f32 0.0, %v974
    %v979 = vsub.f32 0.0, %v975
    %v980 = vsel %vm976, %v978, 0.0
    %v981 = vsel %vm977, %v979, 0.0
    %v984 = vrot.slane %v981, 7
    %v985 = vsel %vm895, %v980, %v984
    %987 = vst.msk [vmem:[#allocation8] sm:$0x3] %vm901, %v985
    // Predicated region
    $region38: #{tpu_custom_call.1} parent=1 // pred_check
      _
    $region39: #{tpu_custom_call.1} parent=1 // pred_check_branch
      %989 = sbr.rel (0) target = $region41
    $region40: #{tpu_custom_call.1} parent=1 // pred_region
      %991 = vsyncadd [#allocation4], 0
      %s993 = sshll.u32 [#allocation7], 4
      %s994 = int_to_ptr.vmem [resolvable:$true] %s993
      %s995 = sshll.u32 %s7, 4
      %s996 = int_to_ptr.hbm [resolvable:$true] %s995
      %998 = dma.vmem_to_hbm [thread:$0]  %s994, 32, %s996, [#allocation4]
    $region41: #{tpu_custom_call.1} parent=1 // pred_fallthru
      _
    // Predicated region
    $region42: #{tpu_custom_call.1} parent=1 // pred_check
      _
    $region43: #{tpu_custom_call.1} parent=1 // pred_check_branch
      %1000 = sbr.rel (0) target = $region45
    $region44: #{tpu_custom_call.1} parent=1 // pred_region
      %1002 = vsyncadd [#allocation9], 0
      %s1004 = sshll.u32 [#allocation8], 4
      %s1005 = int_to_ptr.vmem [resolvable:$true] %s1004
      %s1006 = sshll.u32 %s8, 4
      %s1007 = int_to_ptr.hbm [resolvable:$true] %s1006
      %1009 = dma.vmem_to_hbm [thread:$0]  %s1005, 32, %s1007, [#allocation9]
    $region45: #{tpu_custom_call.1} parent=1 // pred_fallthru
      _
    // Predicated region
    $region46: #{tpu_custom_call.1} parent=1 // pred_check
      _
    $region47: #{tpu_custom_call.1} parent=1 // pred_check_branch
      %1011 = sbr.rel (0) target = $region49
    $region48: #{tpu_custom_call.1} parent=1 // pred_region
      %1013 = dma.done [#allocation4], 32
    $region49: #{tpu_custom_call.1} parent=1 // pred_fallthru
      _
    // Predicated region
    $region50: #{tpu_custom_call.1} parent=1 // pred_check
      _
    $region51: #{tpu_custom_call.1} parent=1 // pred_check_branch
      %1015 = sbr.rel (0) target = $region53
    $region52: #{tpu_custom_call.1} parent=1 // pred_region
      %1017 = dma.done [#allocation9], 32
    $region53: #{tpu_custom_call.1} parent=1 // pred_fallthru
      _
    %1018 = vsyncpa [#allocation3], 1
    %1019 = vsyncpa [#allocation6], 1
    %1020 = vsyncpa [#allocation4], 1
    %1021 = vsyncpa [#allocation9], 1

</llo_original>
